<compile_context>
chip_gen: v7x
topology: tpu7x:2x2x1
jax: 0.10.0
libtpu: 0.0.40
codegen_flags: <defaults>
</compile_context>

<pallas_src>
import jax
import jax.numpy as jnp
from jax.experimental import pallas as pl
from jax.experimental.pallas import tpu as pltpu


def _upsample_add_kernel(x_ref, w_ref, b_ref, l_ref, o_ref):
    # x_ref: (1, th, W, Cin)              high tile (NHWC), reused across ki
    # w_ref: (2, Cin, 2*Cout)             FULL weight, resident (constant index_map)
    # b_ref: (1, 2*Cout)                  bias tiled over kj
    # l_ref, o_ref: (1, th, 1, W, 2*Cout) low / out tile for this (n, h, ki)
    _, th, W, Cin = x_ref.shape
    ki = pl.program_id(2)

    x = x_ref[0].reshape(th * W, Cin)                 # free relayout when W % sublane == 0
    w = w_ref[ki]                                     # (Cin, 2*Cout), dynamic first-axis index
    h = jnp.dot(x, w, preferred_element_type=jnp.float32)   # (th*W, 2*Cout) f32 accumulate
    h = h.reshape(th, W, -1)
    h = h + b_ref[...].astype(jnp.float32) + l_ref[0, :, 0, :, :].astype(jnp.float32)
    o_ref[0, :, 0, :, :] = h.astype(o_ref.dtype)


def _vmem_budgets():
    """(vmem_limit_bytes, per-step block budget) tuned per TPU generation."""
    mib = 1024 * 1024
    try:
        cap = pltpu.get_tpu_info().vmem_capacity_bytes
    except Exception:
        cap = 0  # unknown -> be conservative (v7x-safe)
    if cap >= 128 * mib:          # v5e / v6e: 128 MiB physical VMEM
        return 100 * mib, 44 * mib
    return 48 * mib, 18 * mib     # v7x-class: 64 MiB physical per TensorCore


def _pick_h_tile(H, W, Cin, Cout, itemsize, vmem_block_budget, max_rows=4096):
    """Largest divisor of H whose pipelined blocks (+ f32 intermediate + weights)
    fit the VMEM block budget.  Padding is dtype-aware."""
    sub = 8 * max(1, 4 // itemsize)          # sublane rows: 8 f32, 16 bf16, 32 int8

    def pad(r, c, isz, s=None):
        s = sub if s is None else s
        return (-(-r // s) * s) * (-(-c // 128) * 128) * isz

    def block_bytes(th):
        x_blk = th * pad(W, Cin, itemsize)                  # high tile
        lo_blk = th * pad(W, 2 * Cout, itemsize)            # low / out tiles
        acc = pad(th * W, 2 * Cout, 4, s=8)                 # f32 matmul intermediate
        wb = pad(2 * Cin, 2 * Cout, itemsize) + pad(1, 2 * Cout, itemsize)  # weight + bias
        return 2 * (x_blk + 2 * lo_blk) + acc + 2 * wb      # x2: double buffering

    best = 1
    for th in range(1, H + 1):
        if H % th == 0 and th * W <= max_rows and block_bytes(th) <= vmem_block_budget:
            best = th
    return best


def upsample_add_nhwc(x, l, weight, bias):
    """NHWC fast path: ConvTranspose2d(k=2, s=2)(x) + l.

    x     : (N, H, W, Cin)
    l     : (N, 2H, 2W, Cout)
    weight: (Cin, Cout, 2, 2)   -- PyTorch ConvTranspose2d weight layout
    bias  : (Cout,)
    returns (N, 2H, 2W, Cout)
    """
    N, H, W, Cin = x.shape
    Cout = weight.shape[1]
    dtype = x.dtype
    itemsize = jnp.dtype(dtype).itemsize

    # low viewed as (n, i, ki, j, (kj, oc)) -- FREE reshape of the NHWC buffer.
    l5 = l.reshape(N, H, 2, W, 2 * Cout)

    # weight (Cin, Cout, 2, 2) -> (2(ki), Cin, 2(kj)*Cout); tiny tensor.
    w = jnp.transpose(weight, (2, 0, 3, 1)).reshape(2, Cin, 2 * Cout)
    b = jnp.tile(bias, 2).reshape(1, 2 * Cout)          # bias per (kj, oc) column

    vmem_limit, block_budget = _vmem_budgets()
    th = _pick_h_tile(H, W, Cin, Cout, itemsize, block_budget)
    grid = (N, H // th, 2)                               # (n, h-tile, ki)

    M = N * H * W
    cost = pl.CostEstimate(
        flops=2 * M * Cin * 4 * Cout,
        transcendentals=0,
        bytes_accessed=itemsize * (M * Cin + 8 * M * Cout + 8 * Cin * Cout + 2 * Cout),
    )

    out5 = pl.pallas_call(
        _upsample_add_kernel,
        out_shape=jax.ShapeDtypeStruct((N, H, 2, W, 2 * Cout), dtype),
        grid_spec=pltpu.PrefetchScalarGridSpec(
            num_scalar_prefetch=0,
            grid=grid,
            in_specs=[
                # high tile: index independent of ki (innermost) -> fetched once per (n, h)
                pl.BlockSpec((1, th, W, Cin), lambda n, h, ki: (n, h, 0, 0)),
                # FULL weight, constant block index -> single DMA, resident for the whole grid
                pl.BlockSpec((2, Cin, 2 * Cout), lambda n, h, ki: (0, 0, 0)),
                # bias (constant across the grid)
                pl.BlockSpec((1, 2 * Cout), lambda n, h, ki: (0, 0)),
                # low tile for this (n, h-tile, ki): full (W, 2*Cout) in the last two dims
                pl.BlockSpec((1, th, 1, W, 2 * Cout), lambda n, h, ki: (n, h, ki, 0, 0)),
            ],
            out_specs=pl.BlockSpec((1, th, 1, W, 2 * Cout),
                                   lambda n, h, ki: (n, h, ki, 0, 0)),
        ),
        compiler_params=pltpu.CompilerParams(
            # ki carries no accumulator -> safe to mark parallel; guarantees a
            # parallel axis of extent >= 2 for v7x megacore even when N == 1.
            dimension_semantics=("parallel", "parallel", "parallel"),
            vmem_limit_bytes=vmem_limit,
        ),
        # `low` and the output have identical block indices every step: alias them
        # in place to avoid a second (N,2H,2W,Cout)-sized HBM buffer.
        input_output_aliases={3: 0},
        cost_estimate=cost,
    )(x, w, b, l5)

    return out5.reshape(N, 2 * H, 2 * W, Cout)           # FREE un-view -> NHWC


@jax.jit
def upsample_add(high_nchw, low_nchw, weight, bias):
    """PyTorch-layout wrapper: ConvTranspose2d(k=2, s=2)(high) + low, NCHW in/out.

    The two transposes below (and the final one) are layout glue forced by the
    NCHW API; in an NHWC pipeline call upsample_add_nhwc directly and they
    disappear (biggest system-level win for this bandwidth-bound op).
    """
    x = jnp.transpose(high_nchw, (0, 2, 3, 1))            # (N, H, W, Cin)
    l = jnp.transpose(low_nchw, (0, 2, 3, 1))             # (N, 2H, 2W, Cout)
    out = upsample_add_nhwc(x, l, weight, bias)           # (N, 2H, 2W, Cout)
    return jnp.transpose(out, (0, 3, 1, 2))               # NHWC -> NCHW


if __name__ == "__main__":
    key = jax.random.PRNGKey(0)
    k1, k2, k3, k4 = jax.random.split(key, 4)

    N, Cin, Cout, H, W = 2, 4, 4, 16, 16

    high = jax.random.normal(k1, (N, Cin, H, W), dtype=jnp.float32)
    low = jax.random.normal(k2, (N, Cout, 2 * H, 2 * W), dtype=jnp.float32)
    # Deterministic synthetic ConvTranspose2d params (PyTorch shapes).
    weight = jax.random.normal(k3, (Cin, Cout, 2, 2), dtype=jnp.float32) * 0.1
    bias = jax.random.normal(k4, (Cout,), dtype=jnp.float32) * 0.1

    out = upsample_add(high, low, weight, bias)
    out = jax.block_until_ready(out)

    # Pure-JAX reference of ConvTranspose2d(k=2, s=2)(high) + bias + low.
    h_ref = jnp.einsum("nchw,cokl->nohkwl", high, weight)    # (N,Cout,H,2,W,2)
    h_ref = h_ref.reshape(N, Cout, 2 * H, 2 * W) + bias.reshape(1, Cout, 1, 1)
    ref = h_ref + low

    assert out.shape == (N, Cout, 2 * H, 2 * W)
    assert jnp.allclose(out, ref, atol=1e-4, rtol=1e-4)
    print("KERNEL_OK")
</pallas_src>

<mosaic_0001>
module attributes {stable_mosaic.version = 11 : i64} {
  func.func @_upsample_add_kernel(%arg0: i32, %arg1: i32, %arg2: i32, %arg3: memref<1x16x16x4xf32, #tpu.memory_space<vmem>>, %arg4: memref<2x4x8xf32, #tpu.memory_space<vmem>>, %arg5: memref<1x8xf32, #tpu.memory_space<vmem>>, %arg6: memref<1x16x1x16x8xf32, #tpu.memory_space<vmem>>, %arg7: memref<1x16x1x16x8xf32, #tpu.memory_space<vmem>>) attributes {dimension_semantics = [#tpu.dimension_semantics<parallel>, #tpu.dimension_semantics<parallel>, #tpu.dimension_semantics<parallel>], iteration_bounds = array<i64: 2, 1, 2>, scalar_prefetch = 0 : i64, scratch_operands = 0 : i64, tpu.core_type = #tpu.core_type<tc>, window_params = [{transform_indices = @transform_0, window_bounds = array<i64: 1, 16, 16, 4>}, {pipeline_mode = #tpu.pipeline_mode<synchronous>, transform_indices = @transform_1, window_bounds = array<i64: 2, 4, 8>}, {pipeline_mode = #tpu.pipeline_mode<synchronous>, transform_indices = @transform_2, window_bounds = array<i64: 1, 8>}, {transform_indices = @transform_3, window_bounds = array<i64: 1, 16, 1, 16, 8>}, {transform_indices = @transform_4, window_bounds = array<i64: 1, 16, 1, 16, 8>}]} {
    %c0 = arith.constant 0 : index
    %c0_0 = arith.constant 0 : index
    %c0_1 = arith.constant 0 : index
    %c0_2 = arith.constant 0 : index
    %0 = vector.load %arg3[%c0, %c0_0, %c0_1, %c0_2] : memref<1x16x16x4xf32, #tpu.memory_space<vmem>>, vector<1x16x16x4xf32>
    %1 = vector.shape_cast %0 : vector<1x16x16x4xf32> to vector<16x16x4xf32>
    %2 = vector.shape_cast %1 : vector<16x16x4xf32> to vector<256x4xf32>
    %3 = arith.index_cast %arg2 : i32 to index
    %c0_3 = arith.constant 0 : index
    %c0_4 = arith.constant 0 : index
    %4 = vector.load %arg4[%3, %c0_3, %c0_4] : memref<2x4x8xf32, #tpu.memory_space<vmem>>, vector<1x4x8xf32>
    %5 = vector.shape_cast %4 : vector<1x4x8xf32> to vector<4x8xf32>
    %cst = arith.constant dense<0.000000e+00> : vector<256x8xf32>
    %6 = tpu.matmul %2, %5, %cst {dimension_numbers = #tpu.dot_dimension_numbers<[1], [0], [0], [1], [0, 0, 1, 1], [], []>} : vector<256x4xf32>, vector<4x8xf32>, vector<256x8xf32> -> vector<256x8xf32>
    %7 = vector.shape_cast %6 : vector<256x8xf32> to vector<16x16x8xf32>
    %c0_5 = arith.constant 0 : index
    %c0_6 = arith.constant 0 : index
    %8 = vector.load %arg5[%c0_5, %c0_6] : memref<1x8xf32, #tpu.memory_space<vmem>>, vector<1x8xf32>
    %9 = vector.shape_cast %8 : vector<1x8xf32> to vector<1x1x8xf32>
    %10 = vector.broadcast %9 : vector<1x1x8xf32> to vector<16x16x8xf32>
    %11 = arith.addf %7, %10 : vector<16x16x8xf32>
    %c0_7 = arith.constant 0 : index
    %c0_8 = arith.constant 0 : index
    %c0_9 = arith.constant 0 : index
    %c0_10 = arith.constant 0 : index
    %c0_11 = arith.constant 0 : index
    %12 = vector.load %arg6[%c0_7, %c0_8, %c0_9, %c0_10, %c0_11] : memref<1x16x1x16x8xf32, #tpu.memory_space<vmem>>, vector<1x16x1x16x8xf32>
    %13 = vector.shape_cast %12 : vector<1x16x1x16x8xf32> to vector<16x16x8xf32>
    %14 = arith.addf %11, %13 : vector<16x16x8xf32>
    %c0_12 = arith.constant 0 : index
    %c0_13 = arith.constant 0 : index
    %c0_14 = arith.constant 0 : index
    %c0_15 = arith.constant 0 : index
    %c0_16 = arith.constant 0 : index
    %15 = vector.load %arg7[%c0_12, %c0_13, %c0_14, %c0_15, %c0_16] : memref<1x16x1x16x8xf32, #tpu.memory_space<vmem>>, vector<1x16x1x16x8xf32>
    %16 = vector.shape_cast %15 : vector<1x16x1x16x8xf32> to vector<16x16x8xf32>
    %17 = vector.shape_cast %14 : vector<16x16x8xf32> to vector<1x16x1x16x8xf32>
    tpu.vector_store %arg7[%c0_12, %c0_13, %c0_14, %c0_15, %c0_16], %17 {strides = array<i32>} : memref<1x16x1x16x8xf32, #tpu.memory_space<vmem>>, vector<1x16x1x16x8xf32>,
    return
  }
  func.func @transform_0(%arg0: i32, %arg1: i32, %arg2: i32) -> (i32, i32, i32, i32) {
    %c0_i32 = arith.constant 0 : i32
    %c0_i32_0 = arith.constant 0 : i32
    %c0_i32_1 = arith.constant 0 : i32
    return %arg0, %arg1, %c0_i32, %c0_i32_0 : i32, i32, i32, i32
  }
  func.func @transform_1(%arg0: i32, %arg1: i32, %arg2: i32) -> (i32, i32, i32) {
    %c0_i32 = arith.constant 0 : i32
    %c0_i32_0 = arith.constant 0 : i32
    %c0_i32_1 = arith.constant 0 : i32
    %c0_i32_2 = arith.constant 0 : i32
    return %c0_i32, %c0_i32_0, %c0_i32_1 : i32, i32, i32
  }
  func.func @transform_2(%arg0: i32, %arg1: i32, %arg2: i32) -> (i32, i32) {
    %c0_i32 = arith.constant 0 : i32
    %c0_i32_0 = arith.constant 0 : i32
    %c0_i32_1 = arith.constant 0 : i32
    return %c0_i32, %c0_i32_0 : i32, i32
  }
  func.func @transform_3(%arg0: i32, %arg1: i32, %arg2: i32) -> (i32, i32, i32, i32, i32) {
    %c0_i32 = arith.constant 0 : i32
    %c0_i32_0 = arith.constant 0 : i32
    %c0_i32_1 = arith.constant 0 : i32
    return %arg0, %arg1, %arg2, %c0_i32, %c0_i32_0 : i32, i32, i32, i32, i32
  }
  func.func @transform_4(%arg0: i32, %arg1: i32, %arg2: i32) -> (i32, i32, i32, i32, i32) {
    %c0_i32 = arith.constant 0 : i32
    %c0_i32_0 = arith.constant 0 : i32
    %c0_i32_1 = arith.constant 0 : i32
    return %arg0, %arg1, %arg2, %c0_i32, %c0_i32_0 : i32, i32, i32, i32, i32
  }
}

</mosaic_0001>

<llo_original>
// kernel: tile.8
$region0: #{tile.8}
  #allocation0 [shape = 's32[1]{0}', space=sflag, size = 0x4, scoped, tag = 'scoped memory for tile.8']
  %s0 = inlined_call_operand.vmem [shape: f32[4], index: 0, kind: input, shape index: {}]
  %s1 = inlined_call_operand.vmem [shape: f32[2,4], index: 1, kind: output, shape index: {}]
  // Predicated region
  $region2: #{tile.8} parent=0 // pred_check
    _
  $region3: #{tile.8} parent=0 // pred_check_branch
    %3 = sbr.rel (0) target = $region5
  $region4: #{tile.8} parent=0 // pred_region
    _
  $region5: #{tile.8} parent=0 // pred_fallthru
    _
  %v4 = vld [vmem:[%s0] ss:$0 sm:$0xff]
  %5 = vst [vmem:[%s1] sm:$0x3] %v4

// kernel: tile.9
$region0: #{tile.9}
  %s0 = inlined_call_operand.vmem [shape: f32[2,4], index: 0, kind: input, shape index: {}]
  %s1 = inlined_call_operand.vmem [shape: f32[1,8], index: 1, kind: output, shape index: {}]
  $region1: #{tile.9} parent=0
    #allocation0 [shape = 'u8[4096]{0}', space=vmem, size = 0x1000, scoped, tag = 'scoped mem for output reshape']
    #allocation1 [shape = 'u8[4096]{0}', space=vmem, size = 0x1000, scoped, tag = 'scoped mem for input reshape']
    %s3 = sshllo.u32 0, 2
    %v4 = vld [vmem:[%s0] sm:%s3]
    %5 = vst [vmem:[#allocation1] sm:%s3] %v4
    %v6 = vld [vmem:[#allocation1] sm:$0x1]
    %vm7 = vcmask 31744
    %8 = vst.msk [vmem:[#allocation0] sm:$0x1] %vm7, %v6
    %s9 = scalar_lea.vmem [#allocation1], 1
    %v10 = vld [vmem:[%s9] sm:$0x1]
    %11 = vrot.lane.b32.xlu0 %v10, 4
    %v12 = vpop.permute.xlu0 %11
    %vm13 = vcmask 64544
    %14 = vst.msk [vmem:[#allocation0] sm:$0x1] %vm13, %v12
    %s16 = sshllo.u32 0, 1
    %v18 = vld [vmem:[#allocation0] sm:%s16]
    %s19 = sshllo.u32 0, 1
    %20 = vst [vmem:[%s1] sm:%s19] %v18

// kernel: upsample_add.1
$region0: #{upsample_add.1}
  #allocation0 [shape = 'u32[]', space=smem, size = 0x4, offset = 0x4, fixed_abs, tag = 'smem constant byte address 0x4 - core index']
  #allocation1 [shape = 'u32[144,128]{1,0:T(1,128)}', space=vmem, size = 0x12000, scoped, tag = 'internal scratch']
  %s0 = inlined_call_operand.vmem [shape: f32[2,16,16,4], index: 0, kind: input, shape index: {}]
  %s1 = inlined_call_operand.vmem [shape: f32[2,4,8], index: 1, kind: input, shape index: {}]
  %s2 = inlined_call_operand.vmem [shape: f32[1,8], index: 2, kind: input, shape index: {}]
  %s3 = inlined_call_operand.vmem [shape: f32[2,16,2,16,8], index: 3, kind: input, shape index: {}, may-alias: {3,4}]
  %s4 = inlined_call_operand.vmem [shape: f32[2,16,2,16,8], index: 4, kind: output, shape index: {}, may-alias: {3,4}]
  %s5 = sld [smem:[#allocation0]]
  $region121: #{upsample_add.1} parent=0
    _
  %s7 = ssub.s32 1, %s5
  %s8 = scalar_select 0, %s7, %s5
  $region1: #{upsample_add.1} parent=0
    #allocation2 [shape = 'u8[262144]{0}', space=vmem, size = 0x40000, scoped, tag = 'input window, operand 3']
    #allocation3 [shape = 'u8[262144]{0}', space=vmem, size = 0x40000, scoped, tag = 'output window, operand 0']
    loop: start=0, step=1, limit=6
    $region2: #{upsample_add.1} parent=1 // loop_pre_header
      _
    $region3: #{upsample_add.1} parent=1 // loop_header
      %s10 = sphi 0, %s14
      %p11 = scmp.ge.s32.totalorder %s10, 6
      %s17 = sphi 0, %s36
      %s18 = sphi 0, %s32
      %s19 = sphi 0, %s28
      %s20 = sphi 0, %s17
      %s21 = sphi 0, %s18
      %s22 = sphi 0, %s19
      %s23 = sphi 0, %s20
      %s24 = sphi 0, %s21
      %s25 = sphi 0, %s22
      %s41 = sphi 0, %s43
      %s44 = sphi 0, %s41
      %s45 = sphi 0, %s44
      %s61 = sphi 0, %s45
      %s65 = sphi 0, %s65
      %s67 = sphi 0, %s65
      %s68 = sphi 0, %s67
      %s82 = sphi 0, %s68
      %s86 = sphi 0, %s86
      %s88 = sphi 0, %s86
      %s89 = sphi 0, %s88
      %s103 = sphi 0, %s89
      %s113 = sphi 0, %s115
      %s116 = sphi 0, %s113
      %s117 = sphi 0, %s116
      %s133 = sphi 0, %s117
      %s143 = sphi 0, %s145
      %s146 = sphi 0, %s143
      %s147 = sphi 0, %s146
      %s163 = sphi 0, %s147
    $region4: #{upsample_add.1} parent=1 // loop_header_branch
      %13 = sbr.rel (%p11) target = $region8
    $region5: #{upsample_add.1} parent=1 // loop_body
      %s15 = ssub.s32 %s10, 1
      %s16 = ssub.s32 %s10, 2
      %s26 = sadd.s32 1, %s19
      %p27 = scmp.ge.s32.totalorder %s26, 2
      %s28 = scalar_select %p27, 0, %s26
      %s29 = sadd.s32 1, %s18
      %s30 = scalar_select %p27, %s29, %s18
      %p31 = scmp.ge.s32.totalorder %s30, 1
      %s32 = scalar_select %p31, 0, %s30
      %s33 = sadd.s32 1, %s17
      %s34 = scalar_select %p31, %s33, %s17
      %p35 = scmp.ge.s32.totalorder %s34, 2
      %s36 = scalar_select %p35, 0, %s34
      %s37 = ssub.s32 %s17, %s36
      %s38 = ssub.s32 %s18, %s32
      %s39 = sor.u32 %s37, %s38
      %p40 = scmp.eq.s32.totalorder %s39, 0
      %s42 = sadd.s32 %s41, 1
      %s43 = scalar_select %p40, %s41, %s42
      %p46 = pneg %p40
      %p47 = scmp.eq.s32.totalorder %s10, 3
      %p48 = por %p46, %p47
      %p49 = scmp.ne.s32.totalorder %s41, %s44
      %p50 = scmp.eq.s32.totalorder %s10, 0
      %p51 = por %p49, %p50
      %p52 = scmp.ne.s32.totalorder %s41, %s44
      %p53 = scmp.eq.s32.totalorder %s15, 3
      %p54 = por %p52, %p53
      %p55 = scmp.ne.s32.totalorder %s44, %s45
      %p56 = scmp.eq.s32.totalorder %s15, 0
      %p57 = por %p55, %p56
      %p58 = scmp.ne.s32.totalorder %s44, %s45
      %p59 = scmp.eq.s32.totalorder %s16, 3
      %p60 = por %p58, %p59
      %p62 = scmp.ne.s32.totalorder %s45, %s61
      %p63 = scmp.eq.s32.totalorder %s16, 0
      %p64 = por %p62, %p63
      %s66 = sadd.s32 %s65, 1
      %p69 = scmp.eq.s32.totalorder %s10, 3
      %p70 = scmp.ne.s32.totalorder %s65, %s67
      %p71 = scmp.eq.s32.totalorder %s10, 0
      %p72 = por %p70, %p71
      %p73 = scmp.ne.s32.totalorder %s65, %s67
      %p74 = scmp.eq.s32.totalorder %s15, 3
      %p75 = por %p73, %p74
      %p76 = scmp.ne.s32.totalorder %s67, %s68
      %p77 = scmp.eq.s32.totalorder %s15, 0
      %p78 = por %p76, %p77
      %p79 = scmp.ne.s32.totalorder %s67, %s68
      %p80 = scmp.eq.s32.totalorder %s16, 3
      %p81 = por %p79, %p80
      %p83 = scmp.ne.s32.totalorder %s68, %s82
      %p84 = scmp.eq.s32.totalorder %s16, 0
      %p85 = por %p83, %p84
      %s87 = sadd.s32 %s86, 1
      %p90 = scmp.eq.s32.totalorder %s10, 3
      %p91 = scmp.ne.s32.totalorder %s86, %s88
      %p92 = scmp.eq.s32.totalorder %s10, 0
      %p93 = por %p91, %p92
      %p94 = scmp.ne.s32.totalorder %s86, %s88
      %p95 = scmp.eq.s32.totalorder %s15, 3
      %p96 = por %p94, %p95
      %p97 = scmp.ne.s32.totalorder %s88, %s89
      %p98 = scmp.eq.s32.totalorder %s15, 0
      %p99 = por %p97, %p98
      %p100 = scmp.ne.s32.totalorder %s88, %s89
      %p101 = scmp.eq.s32.totalorder %s16, 3
      %p102 = por %p100, %p101
      %p104 = scmp.ne.s32.totalorder %s89, %s103
      %p105 = scmp.eq.s32.totalorder %s16, 0
      %p106 = por %p104, %p105
      %s107 = ssub.s32 %s17, %s36
      %s108 = ssub.s32 %s18, %s32
      %s109 = sor.u32 %s107, %s108
      %s110 = ssub.s32 %s19, %s28
      %s111 = sor.u32 %s109, %s110
      %p112 = scmp.eq.s32.totalorder %s111, 0
      %s114 = sadd.s32 %s113, 1
      %s115 = scalar_select %p112, %s113, %s114
      %p118 = pneg %p112
      %p119 = scmp.eq.s32.totalorder %s10, 3
      %p120 = por %p118, %p119
      %p121 = scmp.ne.s32.totalorder %s113, %s116
      %p122 = scmp.eq.s32.totalorder %s10, 0
      %p123 = por %p121, %p122
      %p124 = scmp.ne.s32.totalorder %s113, %s116
      %p125 = scmp.eq.s32.totalorder %s15, 3
      %p126 = por %p124, %p125
      %p127 = scmp.ne.s32.totalorder %s116, %s117
      %p128 = scmp.eq.s32.totalorder %s15, 0
      %p129 = por %p127, %p128
      %p130 = scmp.ne.s32.totalorder %s116, %s117
      %p131 = scmp.eq.s32.totalorder %s16, 3
      %p132 = por %p130, %p131
      %p134 = scmp.ne.s32.totalorder %s117, %s133
      %p135 = scmp.eq.s32.totalorder %s16, 0
      %p136 = por %p134, %p135
      %s137 = ssub.s32 %s17, %s36
      %s138 = ssub.s32 %s18, %s32
      %s139 = sor.u32 %s137, %s138
      %s140 = ssub.s32 %s19, %s28
      %s141 = sor.u32 %s139, %s140
      %p142 = scmp.eq.s32.totalorder %s141, 0
      %s144 = sadd.s32 %s143, 1
      %s145 = scalar_select %p142, %s143, %s144
      %p148 = pneg %p142
      %p149 = scmp.eq.s32.totalorder %s10, 3
      %p150 = por %p148, %p149
      %p151 = scmp.ne.s32.totalorder %s143, %s146
      %p152 = scmp.eq.s32.totalorder %s10, 0
      %p153 = por %p151, %p152
      %p154 = scmp.ne.s32.totalorder %s143, %s146
      %p155 = scmp.eq.s32.totalorder %s15, 3
      %p156 = por %p154, %p155
      %p157 = scmp.ne.s32.totalorder %s146, %s147
      %p158 = scmp.eq.s32.totalorder %s15, 0
      %p159 = por %p157, %p158
      %p160 = scmp.ne.s32.totalorder %s146, %s147
      %p161 = scmp.eq.s32.totalorder %s16, 3
      %p162 = por %p160, %p161
      %p164 = scmp.ne.s32.totalorder %s147, %s163
      %p165 = scmp.eq.s32.totalorder %s16, 0
      %p166 = por %p164, %p165
      %p167 = scmp.le.s32.totalorder 1, %s10
      %p168 = scmp.lt.s32.totalorder %s10, 5
      %p169 = pnand %p167, %p168
      %p170 = pneg %p169
      // Predicated region
      $region9: #{upsample_add.1} parent=5 // pred_check
        _
      $region10: #{upsample_add.1} parent=5 // pred_check_branch
        %172 = sbr.rel (%p169) target = $region12
      $region11: #{upsample_add.1} parent=5 // pred_region
        %s173 = ssub.s32 %s10, 1
        // Predicated region
        $region13: #{upsample_add.1} parent=11 // pred_check
          %p174 = pneg %p78
        $region14: #{upsample_add.1} parent=11 // pred_check_branch
          %176 = sbr.rel (%p174) target = $region16
        $region15: #{upsample_add.1} parent=11 // pred_region
          _
        $region16: #{upsample_add.1} parent=11 // pred_fallthru
          _
        // Predicated region
        $region17: #{upsample_add.1} parent=11 // pred_check
          %p177 = pneg %p99
        $region18: #{upsample_add.1} parent=11 // pred_check_branch
          %179 = sbr.rel (%p177) target = $region20
        $region19: #{upsample_add.1} parent=11 // pred_region
          _
        $region20: #{upsample_add.1} parent=11 // pred_fallthru
          _
      $region12: #{upsample_add.1} parent=5 // pred_fallthru
        _
      %p180 = scmp.lt.s32.totalorder %s10, 4
      // Predicated region
      $region21: #{upsample_add.1} parent=5 // pred_check
        %p181 = pneg %p180
      $region22: #{upsample_add.1} parent=5 // pred_check_branch
        %183 = sbr.rel (%p181) target = $region24
      $region23: #{upsample_add.1} parent=5 // pred_region
        // Predicated region
        $region25: #{upsample_add.1} parent=23 // pred_check
          %p184 = pneg %p51
        $region26: #{upsample_add.1} parent=23 // pred_check_branch
          %186 = sbr.rel (%p184) target = $region28
        $region27: #{upsample_add.1} parent=23 // pred_region
          %s187 = smul.u32 16, %s18
          %p188 = scmp.lt.s32.totalorder %s17, 1
          %s189 = scalar_select %p188, %s17, 1
          %p190 = scmp.lt.s32.totalorder %s187, 15
          %s191 = scalar_select %p190, %s187, 15
          %s192 = smul.addr %s191, 2
          %s193 = smul.addr %s189, 32
          %s194 = sadd.s32 %s192, %s193
          %s195 = smul.addr %s194, 8
          %s196 = scalar_lea.vmem %s0, %s195
          %s197 = smul.u32 16, %s18
        $region28: #{upsample_add.1} parent=23 // pred_fallthru
          _
        // Predicated region
        $region29: #{upsample_add.1} parent=23 // pred_check
          %p198 = pneg %p123
        $region30: #{upsample_add.1} parent=23 // pred_check_branch
          %200 = sbr.rel (%p198) target = $region32
        $region31: #{upsample_add.1} parent=23 // pred_region
          %s201 = sand.u32 %s113, 1
          %s202 = sand.u32 %s113, 1
          %s203 = smul.addr %s202, 256
          %s204 = scalar_lea.vmem [#allocation2], %s203
          %s205 = smul.u32 16, %s18
          %s206 = smul.addr %s19, 2
          %s207 = smul.addr %s205, 4
          %s208 = sadd.s32 %s206, %s207
          %s209 = smul.addr %s17, 64
          %s210 = sadd.s32 %s208, %s209
          %s211 = smul.addr %s210, 8
          %s212 = scalar_lea.vmem %s3, %s211
          // Predicated region
          $region33: #{upsample_add.1} parent=31 // pred_check
            _
          $region34: #{upsample_add.1} parent=31 // pred_check_branch
            %214 = sbr.rel (0) target = $region36
          $region35: #{upsample_add.1} parent=31 // pred_region
            // Predicated region
            $region37: #{upsample_add.1} parent=35 // pred_check
              _
            $region38: #{upsample_add.1} parent=35 // pred_check_branch
              %216 = sbr.rel (0) target = $region40
            $region39: #{upsample_add.1} parent=35 // pred_region
              // Predicated region
              $region52: #{upsample_add.1} parent=39 // pred_check
                _
              $region53: #{upsample_add.1} parent=39 // pred_check_branch
                %293 = sbr.rel (0) target = $region55
              $region54: #{upsample_add.1} parent=39 // pred_region
                loop: start=0, step=1, limit=1
                $region56: #{upsample_add.1} parent=54 // loop_pre_header
                  _
                $region57: #{upsample_add.1} parent=54 // loop_header
                  %s295 = sphi 0, %s299
                  %p296 = scmp.ge.s32.totalorder %s295, 1
                  %s300 = sphi %s212, %s212
                  %s301 = sphi %s204, %s204
                $region58: #{upsample_add.1} parent=54 // loop_header_branch
                  %298 = sbr.rel (%p296) target = $region62
                $region59: #{upsample_add.1} parent=54 // loop_body
                  %v302 = vld [vmem:[%s300] sm:$0xff]
                  %303 = vst [vmem:[%s301] sm:$0xff] %v302
                  %v304 = vld [vmem:[%s300 + $0x8] sm:$0xff]
                  %305 = vst [vmem:[%s301 + $0x8] sm:$0xff] %v304
                  %v306 = vld [vmem:[%s300 + $0x20] sm:$0xff]
                  %307 = vst [vmem:[%s301 + $0x10] sm:$0xff] %v306
                  %v308 = vld [vmem:[%s300 + $0x28] sm:$0xff]
                  %309 = vst [vmem:[%s301 + $0x18] sm:$0xff] %v308
                  %v310 = vld [vmem:[%s300 + $0x40] sm:$0xff]
                  %311 = vst [vmem:[%s301 + $0x20] sm:$0xff] %v310
                  %v312 = vld [vmem:[%s300 + $0x48] sm:$0xff]
                  %313 = vst [vmem:[%s301 + $0x28] sm:$0xff] %v312
                  %v314 = vld [vmem:[%s300 + $0x60] sm:$0xff]
                  %315 = vst [vmem:[%s301 + $0x30] sm:$0xff] %v314
                  %v316 = vld [vmem:[%s300 + $0x68] sm:$0xff]
                  %317 = vst [vmem:[%s301 + $0x38] sm:$0xff] %v316
                  %v318 = vld [vmem:[%s300 + $0x80] sm:$0xff]
                  %319 = vst [vmem:[%s301 + $0x40] sm:$0xff] %v318
                  %v320 = vld [vmem:[%s300 + $0x88] sm:$0xff]
                  %321 = vst [vmem:[%s301 + $0x48] sm:$0xff] %v320
                  %v322 = vld [vmem:[%s300 + $0xa0] sm:$0xff]
                  %323 = vst [vmem:[%s301 + $0x50] sm:$0xff] %v322
                  %v324 = vld [vmem:[%s300 + $0xa8] sm:$0xff]
                  %325 = vst [vmem:[%s301 + $0x58] sm:$0xff] %v324
                  %v326 = vld [vmem:[%s300 + $0xc0] sm:$0xff]
                  %327 = vst [vmem:[%s301 + $0x60] sm:$0xff] %v326
                  %v328 = vld [vmem:[%s300 + $0xc8] sm:$0xff]
                  %329 = vst [vmem:[%s301 + $0x68] sm:$0xff] %v328
                  %v330 = vld [vmem:[%s300 + $0xe0] sm:$0xff]
                  %331 = vst [vmem:[%s301 + $0x70] sm:$0xff] %v330
                  %v332 = vld [vmem:[%s300 + $0xe8] sm:$0xff]
                  %333 = vst [vmem:[%s301 + $0x78] sm:$0xff] %v332
                  %v334 = vld [vmem:[%s300 + $0x100] sm:$0xff]
                  %335 = vst [vmem:[%s301 + $0x80] sm:$0xff] %v334
                  %v336 = vld [vmem:[%s300 + $0x108] sm:$0xff]
                  %337 = vst [vmem:[%s301 + $0x88] sm:$0xff] %v336
                  %v338 = vld [vmem:[%s300 + $0x120] sm:$0xff]
                  %339 = vst [vmem:[%s301 + $0x90] sm:$0xff] %v338
                  %v340 = vld [vmem:[%s300 + $0x128] sm:$0xff]
                  %341 = vst [vmem:[%s301 + $0x98] sm:$0xff] %v340
                  %v342 = vld [vmem:[%s300 + $0x140] sm:$0xff]
                  %343 = vst [vmem:[%s301 + $0xa0] sm:$0xff] %v342
                  %v344 = vld [vmem:[%s300 + $0x148] sm:$0xff]
                  %345 = vst [vmem:[%s301 + $0xa8] sm:$0xff] %v344
                  %v346 = vld [vmem:[%s300 + $0x160] sm:$0xff]
                  %347 = vst [vmem:[%s301 + $0xb0] sm:$0xff] %v346
                  %v348 = vld [vmem:[%s300 + $0x168] sm:$0xff]
                  %349 = vst [vmem:[%s301 + $0xb8] sm:$0xff] %v348
                  %v350 = vld [vmem:[%s300 + $0x180] sm:$0xff]
                  %351 = vst [vmem:[%s301 + $0xc0] sm:$0xff] %v350
                  %v352 = vld [vmem:[%s300 + $0x188] sm:$0xff]
                  %353 = vst [vmem:[%s301 + $0xc8] sm:$0xff] %v352
                  %v354 = vld [vmem:[%s300 + $0x1a0] sm:$0xff]
                  %355 = vst [vmem:[%s301 + $0xd0] sm:$0xff] %v354
                  %v356 = vld [vmem:[%s300 + $0x1a8] sm:$0xff]
                  %357 = vst [vmem:[%s301 + $0xd8] sm:$0xff] %v356
                  %v358 = vld [vmem:[%s300 + $0x1c0] sm:$0xff]
                  %359 = vst [vmem:[%s301 + $0xe0] sm:$0xff] %v358
                  %v360 = vld [vmem:[%s300 + $0x1c8] sm:$0xff]
                  %361 = vst [vmem:[%s301 + $0xe8] sm:$0xff] %v360
                  %v362 = vld [vmem:[%s300 + $0x1e0] sm:$0xff]
                  %363 = vst [vmem:[%s301 + $0xf0] sm:$0xff] %v362
                  %v364 = vld [vmem:[%s300 + $0x1e8] sm:$0xff]
                  %365 = vst [vmem:[%s301 + $0xf8] sm:$0xff] %v364
                $region60: #{upsample_add.1} parent=54 // loop_footer
                  %s299 = sadd.s32 1, %s295
                $region61: #{upsample_add.1} parent=54 // loop_footer_branch
                  %294 = sbr.rel target = $region57
                $region62: #{upsample_add.1} parent=54 // loop_exit
                  _
              $region55: #{upsample_add.1} parent=39 // pred_fallthru
                _
              // Predicated region
              $region63: #{upsample_add.1} parent=39 // pred_check
                _
              $region64: #{upsample_add.1} parent=39 // pred_check_branch
                %367 = sbr.rel target = $region66
              $region65: #{upsample_add.1} parent=39 // pred_region
                _
              $region66: #{upsample_add.1} parent=39 // pred_fallthru
                _
            $region40: #{upsample_add.1} parent=35 // pred_fallthru
              _
            // Predicated region
            $region41: #{upsample_add.1} parent=35 // pred_check
              _
            $region42: #{upsample_add.1} parent=35 // pred_check_branch
              %218 = sbr.rel target = $region44
            $region43: #{upsample_add.1} parent=35 // pred_region
              loop: start=0, step=1, limit=1
              $region45: #{upsample_add.1} parent=43 // loop_pre_header
                _
              $region46: #{upsample_add.1} parent=43 // loop_header
                %s221 = sphi 0, %s225
                %p222 = scmp.ge.s32.totalorder %s221, 1
                %s226 = sphi %s212, %s212
                %s227 = sphi %s204, %s204
              $region47: #{upsample_add.1} parent=43 // loop_header_branch
                %224 = sbr.rel (%p222) target = $region51
              $region48: #{upsample_add.1} parent=43 // loop_body
                %v228 = vld [vmem:[%s226] sm:$0xff]
                %229 = vst [vmem:[%s227] sm:$0xff] %v228
                %v230 = vld [vmem:[%s226 + $0x8] sm:$0xff]
                %231 = vst [vmem:[%s227 + $0x8] sm:$0xff] %v230
                %v232 = vld [vmem:[%s226 + $0x20] sm:$0xff]
                %233 = vst [vmem:[%s227 + $0x10] sm:$0xff] %v232
                %v234 = vld [vmem:[%s226 + $0x28] sm:$0xff]
                %235 = vst [vmem:[%s227 + $0x18] sm:$0xff] %v234
                %v236 = vld [vmem:[%s226 + $0x40] sm:$0xff]
                %237 = vst [vmem:[%s227 + $0x20] sm:$0xff] %v236
                %v238 = vld [vmem:[%s226 + $0x48] sm:$0xff]
                %239 = vst [vmem:[%s227 + $0x28] sm:$0xff] %v238
                %v240 = vld [vmem:[%s226 + $0x60] sm:$0xff]
                %241 = vst [vmem:[%s227 + $0x30] sm:$0xff] %v240
                %v242 = vld [vmem:[%s226 + $0x68] sm:$0xff]
                %243 = vst [vmem:[%s227 + $0x38] sm:$0xff] %v242
                %v244 = vld [vmem:[%s226 + $0x80] sm:$0xff]
                %245 = vst [vmem:[%s227 + $0x40] sm:$0xff] %v244
                %v246 = vld [vmem:[%s226 + $0x88] sm:$0xff]
                %247 = vst [vmem:[%s227 + $0x48] sm:$0xff] %v246
                %v248 = vld [vmem:[%s226 + $0xa0] sm:$0xff]
                %249 = vst [vmem:[%s227 + $0x50] sm:$0xff] %v248
                %v250 = vld [vmem:[%s226 + $0xa8] sm:$0xff]
                %251 = vst [vmem:[%s227 + $0x58] sm:$0xff] %v250
                %v252 = vld [vmem:[%s226 + $0xc0] sm:$0xff]
                %253 = vst [vmem:[%s227 + $0x60] sm:$0xff] %v252
                %v254 = vld [vmem:[%s226 + $0xc8] sm:$0xff]
                %255 = vst [vmem:[%s227 + $0x68] sm:$0xff] %v254
                %v256 = vld [vmem:[%s226 + $0xe0] sm:$0xff]
                %257 = vst [vmem:[%s227 + $0x70] sm:$0xff] %v256
                %v258 = vld [vmem:[%s226 + $0xe8] sm:$0xff]
                %259 = vst [vmem:[%s227 + $0x78] sm:$0xff] %v258
                %v260 = vld [vmem:[%s226 + $0x100] sm:$0xff]
                %261 = vst [vmem:[%s227 + $0x80] sm:$0xff] %v260
                %v262 = vld [vmem:[%s226 + $0x108] sm:$0xff]
                %263 = vst [vmem:[%s227 + $0x88] sm:$0xff] %v262
                %v264 = vld [vmem:[%s226 + $0x120] sm:$0xff]
                %265 = vst [vmem:[%s227 + $0x90] sm:$0xff] %v264
                %v266 = vld [vmem:[%s226 + $0x128] sm:$0xff]
                %267 = vst [vmem:[%s227 + $0x98] sm:$0xff] %v266
                %v268 = vld [vmem:[%s226 + $0x140] sm:$0xff]
                %269 = vst [vmem:[%s227 + $0xa0] sm:$0xff] %v268
                %v270 = vld [vmem:[%s226 + $0x148] sm:$0xff]
                %271 = vst [vmem:[%s227 + $0xa8] sm:$0xff] %v270
                %v272 = vld [vmem:[%s226 + $0x160] sm:$0xff]
                %273 = vst [vmem:[%s227 + $0xb0] sm:$0xff] %v272
                %v274 = vld [vmem:[%s226 + $0x168] sm:$0xff]
                %275 = vst [vmem:[%s227 + $0xb8] sm:$0xff] %v274
                %v276 = vld [vmem:[%s226 + $0x180] sm:$0xff]
                %277 = vst [vmem:[%s227 + $0xc0] sm:$0xff] %v276
                %v278 = vld [vmem:[%s226 + $0x188] sm:$0xff]
                %279 = vst [vmem:[%s227 + $0xc8] sm:$0xff] %v278
                %v280 = vld [vmem:[%s226 + $0x1a0] sm:$0xff]
                %281 = vst [vmem:[%s227 + $0xd0] sm:$0xff] %v280
                %v282 = vld [vmem:[%s226 + $0x1a8] sm:$0xff]
                %283 = vst [vmem:[%s227 + $0xd8] sm:$0xff] %v282
                %v284 = vld [vmem:[%s226 + $0x1c0] sm:$0xff]
                %285 = vst [vmem:[%s227 + $0xe0] sm:$0xff] %v284
                %v286 = vld [vmem:[%s226 + $0x1c8] sm:$0xff]
                %287 = vst [vmem:[%s227 + $0xe8] sm:$0xff] %v286
                %v288 = vld [vmem:[%s226 + $0x1e0] sm:$0xff]
                %289 = vst [vmem:[%s227 + $0xf0] sm:$0xff] %v288
                %v290 = vld [vmem:[%s226 + $0x1e8] sm:$0xff]
                %291 = vst [vmem:[%s227 + $0xf8] sm:$0xff] %v290
              $region49: #{upsample_add.1} parent=43 // loop_footer
                %s225 = sadd.s32 1, %s221
              $region50: #{upsample_add.1} parent=43 // loop_footer_branch
                %220 = sbr.rel target = $region46
              $region51: #{upsample_add.1} parent=43 // loop_exit
                _
            $region44: #{upsample_add.1} parent=35 // pred_fallthru
              _
          $region36: #{upsample_add.1} parent=31 // pred_fallthru
            _
          %368 = vnop
        $region32: #{upsample_add.1} parent=23 // pred_fallthru
          _
      $region24: #{upsample_add.1} parent=5 // pred_fallthru
        _
      %p369 = scmp.le.s32.totalorder 1, %s10
      %p370 = scmp.lt.s32.totalorder %s10, 5
      %p371 = pnand %p369, %p370
      %p372 = pneg %p371
      // Predicated region
      $region67: #{upsample_add.1} parent=5 // pred_check
        _
      $region68: #{upsample_add.1} parent=5 // pred_check_branch
        %374 = sbr.rel (%p371) target = $region70
      $region69: #{upsample_add.1} parent=5 // pred_region
        %s375 = ssub.s32 %s10, 1
        %s376 = sand.u32 %s116, 1
        %s377 = sand.u32 %s116, 1
        %s378 = smul.addr %s377, 256
        %s379 = scalar_lea.vmem [#allocation2], %s378
        // Predicated region
        $region71: #{upsample_add.1} parent=69 // pred_check
          %p380 = pneg %p129
        $region72: #{upsample_add.1} parent=69 // pred_check_branch
          %382 = sbr.rel (%p380) target = $region74
        $region73: #{upsample_add.1} parent=69 // pred_region
          _
        $region74: #{upsample_add.1} parent=69 // pred_fallthru
          _
        %s383 = smul.u32 16, %s21
        %p384 = scmp.lt.s32.totalorder %s20, 1
        %s385 = scalar_select %p384, %s20, 1
        %p386 = scmp.lt.s32.totalorder %s383, 15
        %s387 = scalar_select %p386, %s383, 15
        %s388 = smul.addr %s387, 2
        %s389 = smul.addr %s385, 32
        %s390 = sadd.s32 %s388, %s389
        %s391 = smul.addr %s390, 8
        %s392 = scalar_lea.vmem %s0, %s391
        %p393 = pneg %p57
        %p394 = pneg %p54
        %p395 = pneg %p78
        %p396 = pneg %p75
        %p397 = pneg %p99
        %p398 = pneg %p96
        %s399 = sand.u32 %s116, 1
        %s400 = sand.u32 %s116, 1
        %s401 = smul.addr %s400, 256
        %s402 = scalar_lea.vmem [#allocation2], %s401
        %p403 = pneg %p129
        %p404 = pneg %p126
        %p405 = pneg %p159
        %p406 = pneg %p156
        %s407 = sand.u32 %s146, 1
        %s408 = sand.u32 %s146, 1
        %s409 = smul.addr %s408, 256
        %s410 = scalar_lea.vmem [#allocation3], %s409
        %s411 = smul.u32 16, %s21
        %p412 = scmp.lt.s32.totalorder %s20, 1
        %s413 = scalar_select %p412, %s20, 1
        %p414 = scmp.lt.s32.totalorder %s411, 15
        %s415 = scalar_select %p414, %s411, 15
        %s416 = smul.addr %s415, 2
        %s417 = smul.addr %s413, 32
        %s418 = sadd.s32 %s416, %s417
        %s419 = smul.addr %s418, 8
        %s420 = scalar_lea.vmem %s0, %s419
        %s421 = smul.u32 16, %s21
        %s422 = smul.u32 16, %s21
        %s423 = smul.u32 16, %s21
        %v424 = vld [vmem:[%s420] sm:$0xff]
        %v425 = vld [vmem:[%s420 + $0x8] sm:$0xff]
        %v426 = vld [vmem:[%s420 + $0x10] sm:$0xff]
        %v427 = vld [vmem:[%s420 + $0x18] sm:$0xff]
        %v428 = vld [vmem:[%s420 + $0x20] sm:$0xff]
        %v429 = vld [vmem:[%s420 + $0x28] sm:$0xff]
        %v430 = vld [vmem:[%s420 + $0x30] sm:$0xff]
        %v431 = vld [vmem:[%s420 + $0x38] sm:$0xff]
        %v432 = vld [vmem:[%s420 + $0x40] sm:$0xff]
        %v433 = vld [vmem:[%s420 + $0x48] sm:$0xff]
        %v434 = vld [vmem:[%s420 + $0x50] sm:$0xff]
        %v435 = vld [vmem:[%s420 + $0x58] sm:$0xff]
        %v436 = vld [vmem:[%s420 + $0x60] sm:$0xff]
        %v437 = vld [vmem:[%s420 + $0x68] sm:$0xff]
        %v438 = vld [vmem:[%s420 + $0x70] sm:$0xff]
        %v439 = vld [vmem:[%s420 + $0x78] sm:$0xff]
        %v440 = vld [vmem:[%s420 + $0x80] sm:$0xff]
        %v441 = vld [vmem:[%s420 + $0x88] sm:$0xff]
        %v442 = vld [vmem:[%s420 + $0x90] sm:$0xff]
        %v443 = vld [vmem:[%s420 + $0x98] sm:$0xff]
        %v444 = vld [vmem:[%s420 + $0xa0] sm:$0xff]
        %v445 = vld [vmem:[%s420 + $0xa8] sm:$0xff]
        %v446 = vld [vmem:[%s420 + $0xb0] sm:$0xff]
        %v447 = vld [vmem:[%s420 + $0xb8] sm:$0xff]
        %v448 = vld [vmem:[%s420 + $0xc0] sm:$0xff]
        %v449 = vld [vmem:[%s420 + $0xc8] sm:$0xff]
        %v450 = vld [vmem:[%s420 + $0xd0] sm:$0xff]
        %v451 = vld [vmem:[%s420 + $0xd8] sm:$0xff]
        %v452 = vld [vmem:[%s420 + $0xe0] sm:$0xff]
        %v453 = vld [vmem:[%s420 + $0xe8] sm:$0xff]
        %v454 = vld [vmem:[%s420 + $0xf0] sm:$0xff]
        %v455 = vld [vmem:[%s420 + $0xf8] sm:$0xff]
        %s456 = smul.u32 %s22, 4
        %s457 = scalar_lea.vmem %s1, %s456
        %v458 = vld [vmem:[%s457] sm:$0xf]
        %vm459 = vcmask 31744
        %v461 = vsel %vm459, %v424, 0
        %v464 = vsel %vm459, %v425, 0
        %v467 = vsel %vm459, %v426, 0
        %v470 = vsel %vm459, %v427, 0
        %v473 = vsel %vm459, %v428, 0
        %v476 = vsel %vm459, %v429, 0
        %v479 = vsel %vm459, %v430, 0
        %v482 = vsel %vm459, %v431, 0
        %v485 = vsel %vm459, %v432, 0
        %v488 = vsel %vm459, %v433, 0
        %v491 = vsel %vm459, %v434, 0
        %v494 = vsel %vm459, %v435, 0
        %v497 = vsel %vm459, %v436, 0
        %v500 = vsel %vm459, %v437, 0
        %v503 = vsel %vm459, %v438, 0
        %v506 = vsel %vm459, %v439, 0
        %v509 = vsel %vm459, %v440, 0
        %v512 = vsel %vm459, %v441, 0
        %v515 = vsel %vm459, %v442, 0
        %v518 = vsel %vm459, %v443, 0
        %v521 = vsel %vm459, %v444, 0
        %v524 = vsel %vm459, %v445, 0
        %v527 = vsel %vm459, %v446, 0
        %v530 = vsel %vm459, %v447, 0
        %v533 = vsel %vm459, %v448, 0
        %v536 = vsel %vm459, %v449, 0
        %v539 = vsel %vm459, %v450, 0
        %v542 = vsel %vm459, %v451, 0
        %v545 = vsel %vm459, %v452, 0
        %v548 = vsel %vm459, %v453, 0
        %v551 = vsel %vm459, %v454, 0
        %v554 = vsel %vm459, %v455, 0
        %vm556 = vcmask 1043456
        %v558 = vsel %vm556, %v458, 0
        %560 = vmatprep.subr.mxu0 0.0
        %561 = vmatpush1.msra.mxu0 %v558
        %562 = vmatprep.subr.mxu0 0.0
        %563 = vmatpush1.msra.mxu0 0.0
        %564 = vmatprep.subr.mxu0 0.0
        %565 = vmatpush1.msra.mxu0 0.0
        %566 = vmatprep.subr.mxu0 0.0
        %567 = vmatpush1.msra.mxu0 0.0
        %568 = vmatprep.subr.mxu0 0.0
        %569 = vmatpush1.msra.mxu0 0.0
        %570 = vmatprep.subr.mxu0 0.0
        %571 = vmatpush1.msra.mxu0 0.0
        %572 = vmatprep.subr.mxu0 0.0
        %573 = vmatpush1.msra.mxu0 0.0
        %574 = vmatprep.subr.mxu0 0.0
        %575 = vmatpush1.msra.mxu0 0.0
        %576 = vmatprep.subr.mxu0 0.0
        %577 = vmatpush1.msra.mxu0 0.0
        %578 = vmatprep.subr.mxu0 0.0
        %579 = vmatpush1.msra.mxu0 0.0
        %580 = vmatprep.subr.mxu0 0.0
        %581 = vmatpush1.msra.mxu0 0.0
        %582 = vmatprep.subr.mxu0 0.0
        %583 = vmatpush1.msra.mxu0 0.0
        %584 = vmatprep.subr.mxu0 0.0
        %585 = vmatpush1.msra.mxu0 0.0
        %586 = vmatprep.subr.mxu0 0.0
        %587 = vmatpush1.msra.mxu0 0.0
        %588 = vmatprep.subr.mxu0 0.0
        %589 = vmatpush1.msra.mxu0 0.0
        %590 = vmatprep.subr.mxu0 0.0
        %591 = vmatpush1.msra.mxu0 0.0
        %592 = vmatprep.subr.mxu0 0.0
        %593 = vmatpush1.msra.mxu0 0.0
        %594 = vmatprep.subr.mxu0 0.0
        %595 = vmatpush1.msra.mxu0 0.0
        %596 = vmatprep.subr.mxu0 0.0
        %597 = vmatpush1.msra.mxu0 0.0
        %598 = vmatprep.subr.mxu0 0.0
        %599 = vmatpush1.msra.mxu0 0.0
        %600 = vmatprep.subr.mxu0 0.0
        %601 = vmatpush1.msra.mxu0 0.0
        %602 = vmatprep.subr.mxu0 0.0
        %603 = vmatpush1.msra.mxu0 0.0
        %604 = vmatprep.subr.mxu0 0.0
        %605 = vmatpush1.msra.mxu0 0.0
        %606 = vmatprep.subr.mxu0 0.0
        %607 = vmatpush1.msra.mxu0 0.0
        %608 = vmatprep.subr.mxu0 0.0
        %609 = vmatpush1.msra.mxu0 0.0
        %610 = vmatprep.subr.mxu0 0.0
        %611 = vmatpush1.msra.mxu0 0.0
        %612 = vmatprep.subr.mxu0 0.0
        %613 = vmatpush1.msra.mxu0 0.0
        %614 = vmatprep.subr.mxu0 0.0
        %615 = vmatpush1.msra.mxu0 0.0
        %616 = vmatprep.subr.mxu0 0.0
        %617 = vmatpush1.msra.mxu0 0.0
        %618 = vmatprep.subr.mxu0 0.0
        %619 = vmatpush1.msra.mxu0 0.0
        %620 = vmatprep.subr.mxu0 0.0
        %621 = vmatpush1.msra.mxu0 0.0
        %622 = vmatprep.subr.mxu0 0.0
        %623 = vmatpush1.msra.mxu0 0.0
        %624 = vmatprep.mubr.f32.mxu0 0.0
        %625 = vmatmul.mubr.f32.gmra.mrb[0].mxu0 %v461
        %v626 = vpop.f32.mrb[0].mxu0
        %v627 = vadd.f32 0.0, %v626
        %v628 = vpop.f32.mrb[0].mxu0
        %629 = vmatprep.mubr.f32.mxu0 0.0
        %630 = vmatmul.mubr.f32.gmra.mrb[0].mxu0 %v464
        %v631 = vpop.f32.mrb[0].mxu0
        %v632 = vadd.f32 0.0, %v631
        %v633 = vpop.f32.mrb[0].mxu0
        %634 = vmatprep.mubr.f32.mxu0 0.0
        %635 = vmatmul.mubr.f32.gmra.mrb[0].mxu0 %v467
        %v636 = vpop.f32.mrb[0].mxu0
        %v637 = vadd.f32 0.0, %v636
        %v638 = vpop.f32.mrb[0].mxu0
        %639 = vmatprep.mubr.f32.mxu0 0.0
        %640 = vmatmul.mubr.f32.gmra.mrb[0].mxu0 %v470
        %v641 = vpop.f32.mrb[0].mxu0
        %v642 = vadd.f32 0.0, %v641
        %v643 = vpop.f32.mrb[0].mxu0
        %644 = vmatprep.mubr.f32.mxu0 0.0
        %645 = vmatmul.mubr.f32.gmra.mrb[0].mxu0 %v473
        %v646 = vpop.f32.mrb[0].mxu0
        %v647 = vadd.f32 0.0, %v646
        %v648 = vpop.f32.mrb[0].mxu0
        %649 = vmatprep.mubr.f32.mxu0 0.0
        %650 = vmatmul.mubr.f32.gmra.mrb[0].mxu0 %v476
        %v651 = vpop.f32.mrb[0].mxu0
        %v652 = vadd.f32 0.0, %v651
        %v653 = vpop.f32.mrb[0].mxu0
        %654 = vmatprep.mubr.f32.mxu0 0.0
        %655 = vmatmul.mubr.f32.gmra.mrb[0].mxu0 %v479
        %v656 = vpop.f32.mrb[0].mxu0
        %v657 = vadd.f32 0.0, %v656
        %v658 = vpop.f32.mrb[0].mxu0
        %659 = vmatprep.mubr.f32.mxu0 0.0
        %660 = vmatmul.mubr.f32.gmra.mrb[0].mxu0 %v482
        %v661 = vpop.f32.mrb[0].mxu0
        %v662 = vadd.f32 0.0, %v661
        %v663 = vpop.f32.mrb[0].mxu0
        %664 = vmatprep.mubr.f32.mxu0 0.0
        %665 = vmatmul.mubr.f32.gmra.mrb[0].mxu0 %v485
        %v666 = vpop.f32.mrb[0].mxu0
        %v667 = vadd.f32 0.0, %v666
        %v668 = vpop.f32.mrb[0].mxu0
        %669 = vmatprep.mubr.f32.mxu0 0.0
        %670 = vmatmul.mubr.f32.gmra.mrb[0].mxu0 %v488
        %v671 = vpop.f32.mrb[0].mxu0
        %v672 = vadd.f32 0.0, %v671
        %v673 = vpop.f32.mrb[0].mxu0
        %674 = vmatprep.mubr.f32.mxu0 0.0
        %675 = vmatmul.mubr.f32.gmra.mrb[0].mxu0 %v491
        %v676 = vpop.f32.mrb[0].mxu0
        %v677 = vadd.f32 0.0, %v676
        %v678 = vpop.f32.mrb[0].mxu0
        %679 = vmatprep.mubr.f32.mxu0 0.0
        %680 = vmatmul.mubr.f32.gmra.mrb[0].mxu0 %v494
        %v681 = vpop.f32.mrb[0].mxu0
        %v682 = vadd.f32 0.0, %v681
        %v683 = vpop.f32.mrb[0].mxu0
        %684 = vmatprep.mubr.f32.mxu0 0.0
        %685 = vmatmul.mubr.f32.gmra.mrb[0].mxu0 %v497
        %v686 = vpop.f32.mrb[0].mxu0
        %v687 = vadd.f32 0.0, %v686
        %v688 = vpop.f32.mrb[0].mxu0
        %689 = vmatprep.mubr.f32.mxu0 0.0
        %690 = vmatmul.mubr.f32.gmra.mrb[0].mxu0 %v500
        %v691 = vpop.f32.mrb[0].mxu0
        %v692 = vadd.f32 0.0, %v691
        %v693 = vpop.f32.mrb[0].mxu0
        %694 = vmatprep.mubr.f32.mxu0 0.0
        %695 = vmatmul.mubr.f32.gmra.mrb[0].mxu0 %v503
        %v696 = vpop.f32.mrb[0].mxu0
        %v697 = vadd.f32 0.0, %v696
        %v698 = vpop.f32.mrb[0].mxu0
        %699 = vmatprep.mubr.f32.mxu0 0.0
        %700 = vmatmul.mubr.f32.gmra.mrb[0].mxu0 %v506
        %v701 = vpop.f32.mrb[0].mxu0
        %v702 = vadd.f32 0.0, %v701
        %v703 = vpop.f32.mrb[0].mxu0
        %704 = vmatprep.mubr.f32.mxu0 0.0
        %705 = vmatmul.mubr.f32.gmra.mrb[0].mxu0 %v509
        %v706 = vpop.f32.mrb[0].mxu0
        %v707 = vadd.f32 0.0, %v706
        %v708 = vpop.f32.mrb[0].mxu0
        %709 = vmatprep.mubr.f32.mxu0 0.0
        %710 = vmatmul.mubr.f32.gmra.mrb[0].mxu0 %v512
        %v711 = vpop.f32.mrb[0].mxu0
        %v712 = vadd.f32 0.0, %v711
        %v713 = vpop.f32.mrb[0].mxu0
        %714 = vmatprep.mubr.f32.mxu0 0.0
        %715 = vmatmul.mubr.f32.gmra.mrb[0].mxu0 %v515
        %v716 = vpop.f32.mrb[0].mxu0
        %v717 = vadd.f32 0.0, %v716
        %v718 = vpop.f32.mrb[0].mxu0
        %719 = vmatprep.mubr.f32.mxu0 0.0
        %720 = vmatmul.mubr.f32.gmra.mrb[0].mxu0 %v518
        %v721 = vpop.f32.mrb[0].mxu0
        %v722 = vadd.f32 0.0, %v721
        %v723 = vpop.f32.mrb[0].mxu0
        %724 = vmatprep.mubr.f32.mxu0 0.0
        %725 = vmatmul.mubr.f32.gmra.mrb[0].mxu0 %v521
        %v726 = vpop.f32.mrb[0].mxu0
        %v727 = vadd.f32 0.0, %v726
        %v728 = vpop.f32.mrb[0].mxu0
        %729 = vmatprep.mubr.f32.mxu0 0.0
        %730 = vmatmul.mubr.f32.gmra.mrb[0].mxu0 %v524
        %v731 = vpop.f32.mrb[0].mxu0
        %v732 = vadd.f32 0.0, %v731
        %v733 = vpop.f32.mrb[0].mxu0
        %734 = vmatprep.mubr.f32.mxu0 0.0
        %735 = vmatmul.mubr.f32.gmra.mrb[0].mxu0 %v527
        %v736 = vpop.f32.mrb[0].mxu0
        %v737 = vadd.f32 0.0, %v736
        %v738 = vpop.f32.mrb[0].mxu0
        %739 = vmatprep.mubr.f32.mxu0 0.0
        %740 = vmatmul.mubr.f32.gmra.mrb[0].mxu0 %v530
        %v741 = vpop.f32.mrb[0].mxu0
        %v742 = vadd.f32 0.0, %v741
        %v743 = vpop.f32.mrb[0].mxu0
        %744 = vmatprep.mubr.f32.mxu0 0.0
        %745 = vmatmul.mubr.f32.gmra.mrb[0].mxu0 %v533
        %v746 = vpop.f32.mrb[0].mxu0
        %v747 = vadd.f32 0.0, %v746
        %v748 = vpop.f32.mrb[0].mxu0
        %749 = vmatprep.mubr.f32.mxu0 0.0
        %750 = vmatmul.mubr.f32.gmra.mrb[0].mxu0 %v536
        %v751 = vpop.f32.mrb[0].mxu0
        %v752 = vadd.f32 0.0, %v751
        %v753 = vpop.f32.mrb[0].mxu0
        %754 = vmatprep.mubr.f32.mxu0 0.0
        %755 = vmatmul.mubr.f32.gmra.mrb[0].mxu0 %v539
        %v756 = vpop.f32.mrb[0].mxu0
        %v757 = vadd.f32 0.0, %v756
        %v758 = vpop.f32.mrb[0].mxu0
        %759 = vmatprep.mubr.f32.mxu0 0.0
        %760 = vmatmul.mubr.f32.gmra.mrb[0].mxu0 %v542
        %v761 = vpop.f32.mrb[0].mxu0
        %v762 = vadd.f32 0.0, %v761
        %v763 = vpop.f32.mrb[0].mxu0
        %764 = vmatprep.mubr.f32.mxu0 0.0
        %765 = vmatmul.mubr.f32.gmra.mrb[0].mxu0 %v545
        %v766 = vpop.f32.mrb[0].mxu0
        %v767 = vadd.f32 0.0, %v766
        %v768 = vpop.f32.mrb[0].mxu0
        %769 = vmatprep.mubr.f32.mxu0 0.0
        %770 = vmatmul.mubr.f32.gmra.mrb[0].mxu0 %v548
        %v771 = vpop.f32.mrb[0].mxu0
        %v772 = vadd.f32 0.0, %v771
        %v773 = vpop.f32.mrb[0].mxu0
        %774 = vmatprep.mubr.f32.mxu0 0.0
        %775 = vmatmul.mubr.f32.gmra.mrb[0].mxu0 %v551
        %v776 = vpop.f32.mrb[0].mxu0
        %v777 = vadd.f32 0.0, %v776
        %v778 = vpop.f32.mrb[0].mxu0
        %779 = vmatprep.mubr.f32.mxu0 0.0
        %780 = vmatmul.mubr.f32.gmra.mrb[0].mxu0 %v554
        %v781 = vpop.f32.mrb[0].mxu0
        %v782 = vadd.f32 0.0, %v781
        %v783 = vpop.f32.mrb[0].mxu0
        %784 = vdwg.mxu0
        %v785 = vld [vmem:[%s2] sm:$0x1]
        %v787 = vlaneseq
        %v788 = vshrl.u32 %v787, 7
        %v789 = vsub.s32 0, %v788
        %v790 = vrot.slane %v785, %v789
        %v792 = vadd.f32 %v627, %v790
        %v793 = vadd.f32 %v632, %v790
        %v794 = vadd.f32 %v637, %v790
        %v795 = vadd.f32 %v642, %v790
        %v796 = vadd.f32 %v647, %v790
        %v797 = vadd.f32 %v652, %v790
        %v798 = vadd.f32 %v657, %v790
        %v799 = vadd.f32 %v662, %v790
        %v800 = vadd.f32 %v667, %v790
        %v801 = vadd.f32 %v672, %v790
        %v802 = vadd.f32 %v677, %v790
        %v803 = vadd.f32 %v682, %v790
        %v804 = vadd.f32 %v687, %v790
        %v805 = vadd.f32 %v692, %v790
        %v806 = vadd.f32 %v697, %v790
        %v807 = vadd.f32 %v702, %v790
        %v808 = vadd.f32 %v707, %v790
        %v809 = vadd.f32 %v712, %v790
        %v810 = vadd.f32 %v717, %v790
        %v811 = vadd.f32 %v722, %v790
        %v812 = vadd.f32 %v727, %v790
        %v813 = vadd.f32 %v732, %v790
        %v814 = vadd.f32 %v737, %v790
        %v815 = vadd.f32 %v742, %v790
        %v816 = vadd.f32 %v747, %v790
        %v817 = vadd.f32 %v752, %v790
        %v818 = vadd.f32 %v757, %v790
        %v819 = vadd.f32 %v762, %v790
        %v820 = vadd.f32 %v767, %v790
        %v821 = vadd.f32 %v772, %v790
        %v822 = vadd.f32 %v777, %v790
        %v823 = vadd.f32 %v782, %v790
        %v824 = vld [vmem:[%s379] sm:$0xff]
        %v825 = vld [vmem:[%s379 + $0x8] sm:$0xff]
        %v826 = vld [vmem:[%s379 + $0x10] sm:$0xff]
        %v827 = vld [vmem:[%s379 + $0x18] sm:$0xff]
        %v828 = vld [vmem:[%s379 + $0x20] sm:$0xff]
        %v829 = vld [vmem:[%s379 + $0x28] sm:$0xff]
        %v830 = vld [vmem:[%s379 + $0x30] sm:$0xff]
        %v831 = vld [vmem:[%s379 + $0x38] sm:$0xff]
        %v832 = vld [vmem:[%s379 + $0x40] sm:$0xff]
        %v833 = vld [vmem:[%s379 + $0x48] sm:$0xff]
        %v834 = vld [vmem:[%s379 + $0x50] sm:$0xff]
        %v835 = vld [vmem:[%s379 + $0x58] sm:$0xff]
        %v836 = vld [vmem:[%s379 + $0x60] sm:$0xff]
        %v837 = vld [vmem:[%s379 + $0x68] sm:$0xff]
        %v838 = vld [vmem:[%s379 + $0x70] sm:$0xff]
        %v839 = vld [vmem:[%s379 + $0x78] sm:$0xff]
        %v840 = vld [vmem:[%s379 + $0x80] sm:$0xff]
        %v841 = vld [vmem:[%s379 + $0x88] sm:$0xff]
        %v842 = vld [vmem:[%s379 + $0x90] sm:$0xff]
        %v843 = vld [vmem:[%s379 + $0x98] sm:$0xff]
        %v844 = vld [vmem:[%s379 + $0xa0] sm:$0xff]
        %v845 = vld [vmem:[%s379 + $0xa8] sm:$0xff]
        %v846 = vld [vmem:[%s379 + $0xb0] sm:$0xff]
        %v847 = vld [vmem:[%s379 + $0xb8] sm:$0xff]
        %v848 = vld [vmem:[%s379 + $0xc0] sm:$0xff]
        %v849 = vld [vmem:[%s379 + $0xc8] sm:$0xff]
        %v850 = vld [vmem:[%s379 + $0xd0] sm:$0xff]
        %v851 = vld [vmem:[%s379 + $0xd8] sm:$0xff]
        %v852 = vld [vmem:[%s379 + $0xe0] sm:$0xff]
        %v853 = vld [vmem:[%s379 + $0xe8] sm:$0xff]
        %v854 = vld [vmem:[%s379 + $0xf0] sm:$0xff]
        %v855 = vld [vmem:[%s379 + $0xf8] sm:$0xff]
        %v856 = vadd.f32 %v792, %v824
        %v857 = vadd.f32 %v793, %v825
        %v858 = vadd.f32 %v794, %v826
        %v859 = vadd.f32 %v795, %v827
        %v860 = vadd.f32 %v796, %v828
        %v861 = vadd.f32 %v797, %v829
        %v862 = vadd.f32 %v798, %v830
        %v863 = vadd.f32 %v799, %v831
        %v864 = vadd.f32 %v800, %v832
        %v865 = vadd.f32 %v801, %v833
        %v866 = vadd.f32 %v802, %v834
        %v867 = vadd.f32 %v803, %v835
        %v868 = vadd.f32 %v804, %v836
        %v869 = vadd.f32 %v805, %v837
        %v870 = vadd.f32 %v806, %v838
        %v871 = vadd.f32 %v807, %v839
        %v872 = vadd.f32 %v808, %v840
        %v873 = vadd.f32 %v809, %v841
        %v874 = vadd.f32 %v810, %v842
        %v875 = vadd.f32 %v811, %v843
        %v876 = vadd.f32 %v812, %v844
        %v877 = vadd.f32 %v813, %v845
        %v878 = vadd.f32 %v814, %v846
        %v879 = vadd.f32 %v815, %v847
        %v880 = vadd.f32 %v816, %v848
        %v881 = vadd.f32 %v817, %v849
        %v882 = vadd.f32 %v818, %v850
        %v883 = vadd.f32 %v819, %v851
        %v884 = vadd.f32 %v820, %v852
        %v885 = vadd.f32 %v821, %v853
        %v886 = vadd.f32 %v822, %v854
        %v887 = vadd.f32 %v823, %v855
        %vm888 = vcmask 64512
        %889 = vst.msk [vmem:[%s410] sm:$0xff] %vm888, %v856
        %890 = vst.msk [vmem:[%s410 + $0x8] sm:$0xff] %vm888, %v857
        %891 = vst.msk [vmem:[%s410 + $0x10] sm:$0xff] %vm888, %v858
        %892 = vst.msk [vmem:[%s410 + $0x18] sm:$0xff] %vm888, %v859
        %893 = vst.msk [vmem:[%s410 + $0x20] sm:$0xff] %vm888, %v860
        %894 = vst.msk [vmem:[%s410 + $0x28] sm:$0xff] %vm888, %v861
        %895 = vst.msk [vmem:[%s410 + $0x30] sm:$0xff] %vm888, %v862
        %896 = vst.msk [vmem:[%s410 + $0x38] sm:$0xff] %vm888, %v863
        %897 = vst.msk [vmem:[%s410 + $0x40] sm:$0xff] %vm888, %v864
        %898 = vst.msk [vmem:[%s410 + $0x48] sm:$0xff] %vm888, %v865
        %899 = vst.msk [vmem:[%s410 + $0x50] sm:$0xff] %vm888, %v866
        %900 = vst.msk [vmem:[%s410 + $0x58] sm:$0xff] %vm888, %v867
        %901 = vst.msk [vmem:[%s410 + $0x60] sm:$0xff] %vm888, %v868
        %902 = vst.msk [vmem:[%s410 + $0x68] sm:$0xff] %vm888, %v869
        %903 = vst.msk [vmem:[%s410 + $0x70] sm:$0xff] %vm888, %v870
        %904 = vst.msk [vmem:[%s410 + $0x78] sm:$0xff] %vm888, %v871
        %905 = vst.msk [vmem:[%s410 + $0x80] sm:$0xff] %vm888, %v872
        %906 = vst.msk [vmem:[%s410 + $0x88] sm:$0xff] %vm888, %v873
        %907 = vst.msk [vmem:[%s410 + $0x90] sm:$0xff] %vm888, %v874
        %908 = vst.msk [vmem:[%s410 + $0x98] sm:$0xff] %vm888, %v875
        %909 = vst.msk [vmem:[%s410 + $0xa0] sm:$0xff] %vm888, %v876
        %910 = vst.msk [vmem:[%s410 + $0xa8] sm:$0xff] %vm888, %v877
        %911 = vst.msk [vmem:[%s410 + $0xb0] sm:$0xff] %vm888, %v878
        %912 = vst.msk [vmem:[%s410 + $0xb8] sm:$0xff] %vm888, %v879
        %913 = vst.msk [vmem:[%s410 + $0xc0] sm:$0xff] %vm888, %v880
        %914 = vst.msk [vmem:[%s410 + $0xc8] sm:$0xff] %vm888, %v881
        %915 = vst.msk [vmem:[%s410 + $0xd0] sm:$0xff] %vm888, %v882
        %916 = vst.msk [vmem:[%s410 + $0xd8] sm:$0xff] %vm888, %v883
        %917 = vst.msk [vmem:[%s410 + $0xe0] sm:$0xff] %vm888, %v884
        %918 = vst.msk [vmem:[%s410 + $0xe8] sm:$0xff] %vm888, %v885
        %919 = vst.msk [vmem:[%s410 + $0xf0] sm:$0xff] %vm888, %v886
        %920 = vst.msk [vmem:[%s410 + $0xf8] sm:$0xff] %vm888, %v887
        %s921 = sand.u32 %s146, 1
        %s922 = sand.u32 %s146, 1
        %s923 = smul.addr %s922, 256
        %s924 = scalar_lea.vmem [#allocation3], %s923
        // Predicated region
        $region75: #{upsample_add.1} parent=69 // pred_check
          %p925 = pneg %p156
        $region76: #{upsample_add.1} parent=69 // pred_check_branch
          %927 = sbr.rel (%p925) target = $region78
        $region77: #{upsample_add.1} parent=69 // pred_region
          %s928 = smul.u32 16, %s21
          %s929 = smul.addr %s22, 2
          %s930 = smul.addr %s928, 4
          %s931 = sadd.s32 %s929, %s930
          %s932 = smul.addr %s20, 64
          %s933 = sadd.s32 %s931, %s932
          %s934 = smul.addr %s933, 8
          %s935 = scalar_lea.vmem %s4, %s934
          // Predicated region
          $region79: #{upsample_add.1} parent=77 // pred_check
            _
          $region80: #{upsample_add.1} parent=77 // pred_check_branch
            %937 = sbr.rel (0) target = $region82
          $region81: #{upsample_add.1} parent=77 // pred_region
            // Predicated region
            $region83: #{upsample_add.1} parent=81 // pred_check
              _
            $region84: #{upsample_add.1} parent=81 // pred_check_branch
              %939 = sbr.rel (0) target = $region86
            $region85: #{upsample_add.1} parent=81 // pred_region
              // Predicated region
              $region98: #{upsample_add.1} parent=85 // pred_check
                _
              $region99: #{upsample_add.1} parent=85 // pred_check_branch
                %1016 = sbr.rel (0) target = $region101
              $region100: #{upsample_add.1} parent=85 // pred_region
                loop: start=0, step=1, limit=1
                $region102: #{upsample_add.1} parent=100 // loop_pre_header
                  _
                $region103: #{upsample_add.1} parent=100 // loop_header
                  %s1018 = sphi 0, %s1022
                  %p1019 = scmp.ge.s32.totalorder %s1018, 1
                  %s1023 = sphi %s924, %s924
                  %s1024 = sphi %s935, %s935
                $region104: #{upsample_add.1} parent=100 // loop_header_branch
                  %1021 = sbr.rel (%p1019) target = $region108
                $region105: #{upsample_add.1} parent=100 // loop_body
                  %v1025 = vld [vmem:[%s1023] sm:$0xff]
                  %1026 = vst [vmem:[%s1024] sm:$0xff] %v1025
                  %v1027 = vld [vmem:[%s1023 + $0x8] sm:$0xff]
                  %1028 = vst [vmem:[%s1024 + $0x8] sm:$0xff] %v1027
                  %v1029 = vld [vmem:[%s1023 + $0x10] sm:$0xff]
                  %1030 = vst [vmem:[%s1024 + $0x20] sm:$0xff] %v1029
                  %v1031 = vld [vmem:[%s1023 + $0x18] sm:$0xff]
                  %1032 = vst [vmem:[%s1024 + $0x28] sm:$0xff] %v1031
                  %v1033 = vld [vmem:[%s1023 + $0x20] sm:$0xff]
                  %1034 = vst [vmem:[%s1024 + $0x40] sm:$0xff] %v1033
                  %v1035 = vld [vmem:[%s1023 + $0x28] sm:$0xff]
                  %1036 = vst [vmem:[%s1024 + $0x48] sm:$0xff] %v1035
                  %v1037 = vld [vmem:[%s1023 + $0x30] sm:$0xff]
                  %1038 = vst [vmem:[%s1024 + $0x60] sm:$0xff] %v1037
                  %v1039 = vld [vmem:[%s1023 + $0x38] sm:$0xff]
                  %1040 = vst [vmem:[%s1024 + $0x68] sm:$0xff] %v1039
                  %v1041 = vld [vmem:[%s1023 + $0x40] sm:$0xff]
                  %1042 = vst [vmem:[%s1024 + $0x80] sm:$0xff] %v1041
                  %v1043 = vld [vmem:[%s1023 + $0x48] sm:$0xff]
                  %1044 = vst [vmem:[%s1024 + $0x88] sm:$0xff] %v1043
                  %v1045 = vld [vmem:[%s1023 + $0x50] sm:$0xff]
                  %1046 = vst [vmem:[%s1024 + $0xa0] sm:$0xff] %v1045
                  %v1047 = vld [vmem:[%s1023 + $0x58] sm:$0xff]
                  %1048 = vst [vmem:[%s1024 + $0xa8] sm:$0xff] %v1047
                  %v1049 = vld [vmem:[%s1023 + $0x60] sm:$0xff]
                  %1050 = vst [vmem:[%s1024 + $0xc0] sm:$0xff] %v1049
                  %v1051 = vld [vmem:[%s1023 + $0x68] sm:$0xff]
                  %1052 = vst [vmem:[%s1024 + $0xc8] sm:$0xff] %v1051
                  %v1053 = vld [vmem:[%s1023 + $0x70] sm:$0xff]
                  %1054 = vst [vmem:[%s1024 + $0xe0] sm:$0xff] %v1053
                  %v1055 = vld [vmem:[%s1023 + $0x78] sm:$0xff]
                  %1056 = vst [vmem:[%s1024 + $0xe8] sm:$0xff] %v1055
                  %v1057 = vld [vmem:[%s1023 + $0x80] sm:$0xff]
                  %1058 = vst [vmem:[%s1024 + $0x100] sm:$0xff] %v1057
                  %v1059 = vld [vmem:[%s1023 + $0x88] sm:$0xff]
                  %1060 = vst [vmem:[%s1024 + $0x108] sm:$0xff] %v1059
                  %v1061 = vld [vmem:[%s1023 + $0x90] sm:$0xff]
                  %1062 = vst [vmem:[%s1024 + $0x120] sm:$0xff] %v1061
                  %v1063 = vld [vmem:[%s1023 + $0x98] sm:$0xff]
                  %1064 = vst [vmem:[%s1024 + $0x128] sm:$0xff] %v1063
                  %v1065 = vld [vmem:[%s1023 + $0xa0] sm:$0xff]
                  %1066 = vst [vmem:[%s1024 + $0x140] sm:$0xff] %v1065
                  %v1067 = vld [vmem:[%s1023 + $0xa8] sm:$0xff]
                  %1068 = vst [vmem:[%s1024 + $0x148] sm:$0xff] %v1067
                  %v1069 = vld [vmem:[%s1023 + $0xb0] sm:$0xff]
                  %1070 = vst [vmem:[%s1024 + $0x160] sm:$0xff] %v1069
                  %v1071 = vld [vmem:[%s1023 + $0xb8] sm:$0xff]
                  %1072 = vst [vmem:[%s1024 + $0x168] sm:$0xff] %v1071
                  %v1073 = vld [vmem:[%s1023 + $0xc0] sm:$0xff]
                  %1074 = vst [vmem:[%s1024 + $0x180] sm:$0xff] %v1073
                  %v1075 = vld [vmem:[%s1023 + $0xc8] sm:$0xff]
                  %1076 = vst [vmem:[%s1024 + $0x188] sm:$0xff] %v1075
                  %v1077 = vld [vmem:[%s1023 + $0xd0] sm:$0xff]
                  %1078 = vst [vmem:[%s1024 + $0x1a0] sm:$0xff] %v1077
                  %v1079 = vld [vmem:[%s1023 + $0xd8] sm:$0xff]
                  %1080 = vst [vmem:[%s1024 + $0x1a8] sm:$0xff] %v1079
                  %v1081 = vld [vmem:[%s1023 + $0xe0] sm:$0xff]
                  %1082 = vst [vmem:[%s1024 + $0x1c0] sm:$0xff] %v1081
                  %v1083 = vld [vmem:[%s1023 + $0xe8] sm:$0xff]
                  %1084 = vst [vmem:[%s1024 + $0x1c8] sm:$0xff] %v1083
                  %v1085 = vld [vmem:[%s1023 + $0xf0] sm:$0xff]
                  %1086 = vst [vmem:[%s1024 + $0x1e0] sm:$0xff] %v1085
                  %v1087 = vld [vmem:[%s1023 + $0xf8] sm:$0xff]
                  %1088 = vst [vmem:[%s1024 + $0x1e8] sm:$0xff] %v1087
                $region106: #{upsample_add.1} parent=100 // loop_footer
                  %s1022 = sadd.s32 1, %s1018
                $region107: #{upsample_add.1} parent=100 // loop_footer_branch
                  %1017 = sbr.rel target = $region103
                $region108: #{upsample_add.1} parent=100 // loop_exit
                  _
              $region101: #{upsample_add.1} parent=85 // pred_fallthru
                _
              // Predicated region
              $region109: #{upsample_add.1} parent=85 // pred_check
                _
              $region110: #{upsample_add.1} parent=85 // pred_check_branch
                %1090 = sbr.rel target = $region112
              $region111: #{upsample_add.1} parent=85 // pred_region
                _
              $region112: #{upsample_add.1} parent=85 // pred_fallthru
                _
            $region86: #{upsample_add.1} parent=81 // pred_fallthru
              _
            // Predicated region
            $region87: #{upsample_add.1} parent=81 // pred_check
              _
            $region88: #{upsample_add.1} parent=81 // pred_check_branch
              %941 = sbr.rel target = $region90
            $region89: #{upsample_add.1} parent=81 // pred_region
              loop: start=0, step=1, limit=1
              $region91: #{upsample_add.1} parent=89 // loop_pre_header
                _
              $region92: #{upsample_add.1} parent=89 // loop_header
                %s944 = sphi 0, %s948
                %p945 = scmp.ge.s32.totalorder %s944, 1
                %s949 = sphi %s924, %s924
                %s950 = sphi %s935, %s935
              $region93: #{upsample_add.1} parent=89 // loop_header_branch
                %947 = sbr.rel (%p945) target = $region97
              $region94: #{upsample_add.1} parent=89 // loop_body
                %v951 = vld [vmem:[%s949] sm:$0xff]
                %952 = vst [vmem:[%s950] sm:$0xff] %v951
                %v953 = vld [vmem:[%s949 + $0x8] sm:$0xff]
                %954 = vst [vmem:[%s950 + $0x8] sm:$0xff] %v953
                %v955 = vld [vmem:[%s949 + $0x10] sm:$0xff]
                %956 = vst [vmem:[%s950 + $0x20] sm:$0xff] %v955
                %v957 = vld [vmem:[%s949 + $0x18] sm:$0xff]
                %958 = vst [vmem:[%s950 + $0x28] sm:$0xff] %v957
                %v959 = vld [vmem:[%s949 + $0x20] sm:$0xff]
                %960 = vst [vmem:[%s950 + $0x40] sm:$0xff] %v959
                %v961 = vld [vmem:[%s949 + $0x28] sm:$0xff]
                %962 = vst [vmem:[%s950 + $0x48] sm:$0xff] %v961
                %v963 = vld [vmem:[%s949 + $0x30] sm:$0xff]
                %964 = vst [vmem:[%s950 + $0x60] sm:$0xff] %v963
                %v965 = vld [vmem:[%s949 + $0x38] sm:$0xff]
                %966 = vst [vmem:[%s950 + $0x68] sm:$0xff] %v965
                %v967 = vld [vmem:[%s949 + $0x40] sm:$0xff]
                %968 = vst [vmem:[%s950 + $0x80] sm:$0xff] %v967
                %v969 = vld [vmem:[%s949 + $0x48] sm:$0xff]
                %970 = vst [vmem:[%s950 + $0x88] sm:$0xff] %v969
                %v971 = vld [vmem:[%s949 + $0x50] sm:$0xff]
                %972 = vst [vmem:[%s950 + $0xa0] sm:$0xff] %v971
                %v973 = vld [vmem:[%s949 + $0x58] sm:$0xff]
                %974 = vst [vmem:[%s950 + $0xa8] sm:$0xff] %v973
                %v975 = vld [vmem:[%s949 + $0x60] sm:$0xff]
                %976 = vst [vmem:[%s950 + $0xc0] sm:$0xff] %v975
                %v977 = vld [vmem:[%s949 + $0x68] sm:$0xff]
                %978 = vst [vmem:[%s950 + $0xc8] sm:$0xff] %v977
                %v979 = vld [vmem:[%s949 + $0x70] sm:$0xff]
                %980 = vst [vmem:[%s950 + $0xe0] sm:$0xff] %v979
                %v981 = vld [vmem:[%s949 + $0x78] sm:$0xff]
                %982 = vst [vmem:[%s950 + $0xe8] sm:$0xff] %v981
                %v983 = vld [vmem:[%s949 + $0x80] sm:$0xff]
                %984 = vst [vmem:[%s950 + $0x100] sm:$0xff] %v983
                %v985 = vld [vmem:[%s949 + $0x88] sm:$0xff]
                %986 = vst [vmem:[%s950 + $0x108] sm:$0xff] %v985
                %v987 = vld [vmem:[%s949 + $0x90] sm:$0xff]
                %988 = vst [vmem:[%s950 + $0x120] sm:$0xff] %v987
                %v989 = vld [vmem:[%s949 + $0x98] sm:$0xff]
                %990 = vst [vmem:[%s950 + $0x128] sm:$0xff] %v989
                %v991 = vld [vmem:[%s949 + $0xa0] sm:$0xff]
                %992 = vst [vmem:[%s950 + $0x140] sm:$0xff] %v991
                %v993 = vld [vmem:[%s949 + $0xa8] sm:$0xff]
                %994 = vst [vmem:[%s950 + $0x148] sm:$0xff] %v993
                %v995 = vld [vmem:[%s949 + $0xb0] sm:$0xff]
                %996 = vst [vmem:[%s950 + $0x160] sm:$0xff] %v995
                %v997 = vld [vmem:[%s949 + $0xb8] sm:$0xff]
                %998 = vst [vmem:[%s950 + $0x168] sm:$0xff] %v997
                %v999 = vld [vmem:[%s949 + $0xc0] sm:$0xff]
                %1000 = vst [vmem:[%s950 + $0x180] sm:$0xff] %v999
                %v1001 = vld [vmem:[%s949 + $0xc8] sm:$0xff]
                %1002 = vst [vmem:[%s950 + $0x188] sm:$0xff] %v1001
                %v1003 = vld [vmem:[%s949 + $0xd0] sm:$0xff]
                %1004 = vst [vmem:[%s950 + $0x1a0] sm:$0xff] %v1003
                %v1005 = vld [vmem:[%s949 + $0xd8] sm:$0xff]
                %1006 = vst [vmem:[%s950 + $0x1a8] sm:$0xff] %v1005
                %v1007 = vld [vmem:[%s949 + $0xe0] sm:$0xff]
                %1008 = vst [vmem:[%s950 + $0x1c0] sm:$0xff] %v1007
                %v1009 = vld [vmem:[%s949 + $0xe8] sm:$0xff]
                %1010 = vst [vmem:[%s950 + $0x1c8] sm:$0xff] %v1009
                %v1011 = vld [vmem:[%s949 + $0xf0] sm:$0xff]
                %1012 = vst [vmem:[%s950 + $0x1e0] sm:$0xff] %v1011
                %v1013 = vld [vmem:[%s949 + $0xf8] sm:$0xff]
                %1014 = vst [vmem:[%s950 + $0x1e8] sm:$0xff] %v1013
              $region95: #{upsample_add.1} parent=89 // loop_footer
                %s948 = sadd.s32 1, %s944
              $region96: #{upsample_add.1} parent=89 // loop_footer_branch
                %943 = sbr.rel target = $region92
              $region97: #{upsample_add.1} parent=89 // loop_exit
                _
            $region90: #{upsample_add.1} parent=81 // pred_fallthru
              _
          $region82: #{upsample_add.1} parent=77 // pred_fallthru
            _
          %1091 = vnop
        $region78: #{upsample_add.1} parent=69 // pred_fallthru
          _
      $region70: #{upsample_add.1} parent=5 // pred_fallthru
        _
      %p1092 = scmp.le.s32.totalorder 2, %s10
      // Predicated region
      $region113: #{upsample_add.1} parent=5 // pred_check
        %p1093 = pneg %p1092
      $region114: #{upsample_add.1} parent=5 // pred_check_branch
        %1095 = sbr.rel (%p1093) target = $region116
      $region115: #{upsample_add.1} parent=5 // pred_region
        %s1096 = ssub.s32 %s10, 2
        // Predicated region
        $region117: #{upsample_add.1} parent=115 // pred_check
          %p1097 = pneg %p162
        $region118: #{upsample_add.1} parent=115 // pred_check_branch
          %1099 = sbr.rel (%p1097) target = $region120
        $region119: #{upsample_add.1} parent=115 // pred_region
          %s1100 = sand.u32 %s147, 1
          %s1101 = sand.u32 %s147, 1
          %s1102 = smul.addr %s1101, 256
          %s1103 = scalar_lea.vmem [#allocation3], %s1102
        $region120: #{upsample_add.1} parent=115 // pred_fallthru
          _
      $region116: #{upsample_add.1} parent=5 // pred_fallthru
        _
    $region6: #{upsample_add.1} parent=1 // loop_footer
      %s14 = sadd.s32 1, %s10
    $region7: #{upsample_add.1} parent=1 // loop_footer_branch
      %9 = sbr.rel target = $region3
    $region8: #{upsample_add.1} parent=1 // loop_exit
      _

</llo_original>
